<compile_context>
chip_gen: v7x
topology: tpu7x:2x2x1
jax: 0.10.0
libtpu: 0.0.40
codegen_flags: <defaults>
</compile_context>

<pallas_src>
import functools

import jax
import jax.numpy as jnp
from jax.experimental import pallas as pl
from jax.experimental.pallas import tpu as pltpu


# b_tile * hw_tile element budget: 18 f32 rows (in + out) * 4 B * 2 (double
# buffer) = 144 B per (batch, lane) element -> 64k elements ~ 9.4 MiB, well
# under the 16/32/32 MiB scoped-VMEM defaults (v5e/v6e/v7x).
_ELEM_BUDGET = 1 << 16


def _yolo_infer_kernel(gxy_ref, x_ref, w_ref, ws_ref, o_ref, *, stride, b_tile):
    """Decode one (batch-tile, lane-tile) block.

    gxy_ref: (2, T)          precomputed (grid + 0.5) * stride for this lane tile
    x_ref:   (b_tile, C, T)  raw network output, C = 5 + num_classes
    w_ref:   (2, C)          1x1 guide_wh conv weight
    ws_ref:  (2, 1)          exp(guide_wh bias) * stride
    o_ref:   (b_tile, C, T)  decoded output (bx, by, bw, bh, conf, cls...)
    """
    half_s = jnp.float32(0.5 * stride)
    gxy = gxy_ref[...]                      # (2, T)
    w = w_ref[...]                          # (2, C)
    ws = ws_ref[...]                        # (2, 1)

    for b in range(b_tile):                 # static unroll over folded batch rows
        xb = x_ref.at[b]                    # (C, T) ref view
        ob = o_ref.at[b]                    # (C, T) ref view

        # guide_wh 1x1 conv over channels == (2, C) @ (C, T) on the (idle) MXU.
        # Full slab is only live inside the dot.
        conv = jnp.dot(w, xb[...], preferred_element_type=jnp.float32)   # (2, T)

        # Box centers: (sigmoid(txy) + grid) * stride
        #            = 0.5*stride*tanh(0.5*txy) + (grid + 0.5)*stride
        # (one EUP push per element; grid shift/scale pre-folded into gxy).
        ob[0:2, :] = half_s * jnp.tanh(0.5 * xb[0:2, :]) + gxy

        # Box sizes: exp(raw_wh)*exp(W@x + bias)*stride
        #          = exp(raw_wh + W@x) * (exp(bias)*stride)   (fused exp).
        ob[2:4, :] = jnp.exp(xb[2:4, :] + conv) * ws

        # Objectness + class probabilities: grouped tanh-form sigmoid.
        ob[4:, :] = 0.5 * jnp.tanh(0.5 * xb[4:, :]) + 0.5


def _choose_tiling(hw_pad, bs):
    """Pick (hw_tile, n_tiles, b_tile, b_steps).

    hw_tile: multiple of 128 dividing hw_pad, as large as the VMEM budget
             allows. b_tile: as many batch rows per step as the budget allows,
             reduced only if needed to keep >= 2 total grid steps (v7x megacore).
    """
    divisors = [t for t in range(128, hw_pad + 1, 128)
                if hw_pad % t == 0 and t <= _ELEM_BUDGET]
    hw_tile = max(divisors)                     # 128 always present
    if bs == 1:
        # Batch axis cannot provide parallel steps -> prefer >= 2 lane tiles.
        two_step = [t for t in divisors if hw_pad // t >= 2]
        if two_step:
            hw_tile = max(two_step)
    n_tiles = hw_pad // hw_tile

    max_b = max(1, _ELEM_BUDGET // hw_tile)
    b_tile = 1
    for cand in range(min(bs, max_b), 0, -1):   # largest divisor of bs <= max_b
        if bs % cand == 0:
            b_tile = cand
            break
    if n_tiles * (bs // b_tile) < 2 and bs >= 2:
        # Keep >= 2 grid steps so both v7x TensorCores get work.
        for cand in range(bs // 2, 0, -1):
            if bs % cand == 0:
                b_tile = cand
                break
    return hw_tile, n_tiles, b_tile, bs // b_tile


def yolo_forward_infer(x_nchw, conv_w, conv_b, *, stride, num_classes,
                       channels_last=False):
    """Inference path of YOLOLoss.forward (targets=None).

    x_nchw : (bs, 5+num_classes, H, W)  float32  (free_anchors == 1)
    conv_w : (2, 5+num_classes, 1, 1)   guide_wh weight
    conv_b : (2,)                       guide_wh bias
    returns: (bs, 5+num_classes, H*W) lane-dense (default), or
             (bs, H*W, 5+num_classes) if channels_last (PyTorch layout parity;
             the transpose is layout plumbing only — fuse it into the consumer
             if possible).
    """
    bs, c, in_h, in_w = x_nchw.shape
    attrs = 5 + num_classes
    assert c == attrs
    hw = in_h * in_w
    hw_pad = pl.cdiv(hw, 128) * 128

    x_flat = x_nchw.reshape(bs, c, hw).astype(jnp.float32)
    if hw_pad != hw:
        x_flat = jnp.pad(x_flat, ((0, 0), (0, 0), (0, hw_pad - hw)))

    w2d = conv_w.reshape(2, c).astype(jnp.float32)
    # Fold conv bias and stride into one precomputed scale.
    wh_scale = (jnp.exp(conv_b.astype(jnp.float32)) * stride).reshape(2, 1)

    # Precomputed grid offsets, row-major flattening (p = h*W + w):
    # gxy = (grid + 0.5) * stride  (the +0.5 absorbs the sigmoid's tanh shift).
    gx = jnp.tile(jnp.arange(in_w, dtype=jnp.float32)[None, :], (in_h, 1)).reshape(-1)
    gy = jnp.repeat(jnp.arange(in_h, dtype=jnp.float32), in_w)
    gxy = (jnp.stack([gx, gy], axis=0) + 0.5) * jnp.float32(stride)   # (2, HW)
    if hw_pad != hw:
        gxy = jnp.pad(gxy, ((0, 0), (0, hw_pad - hw)))

    hw_tile, n_tiles, b_tile, b_steps = _choose_tiling(hw_pad, bs)

    kernel = functools.partial(_yolo_infer_kernel, stride=stride, b_tile=b_tile)

    out = pl.pallas_call(
        kernel,
        out_shape=jax.ShapeDtypeStruct((bs, attrs, hw_pad), jnp.float32),
        # Lane-tile axis outermost, batch axis innermost: gxy's block index is
        # invariant across consecutive (inner) steps -> fetched once per tile.
        grid=(n_tiles, b_steps),
        in_specs=[
            pl.BlockSpec((2, hw_tile), lambda j, b: (0, j)),          # grid offsets
            pl.BlockSpec((b_tile, c, hw_tile), lambda j, b: (b, 0, j)),  # input slab
            pl.BlockSpec((2, c), lambda j, b: (0, 0)),                # conv weight
            pl.BlockSpec((2, 1), lambda j, b: (0, 0)),                # exp(bias)*stride
        ],
        out_specs=pl.BlockSpec((b_tile, attrs, hw_tile), lambda j, b: (b, 0, j)),
        compiler_params=pltpu.CompilerParams(
            dimension_semantics=("parallel", "parallel")),
    )(gxy, x_flat, w2d, wh_scale)

    if hw_pad != hw:
        out = out[:, :, :hw]
    if not channels_last:
        return out                                  # (bs, attrs, HW), lane-dense
    return jnp.transpose(out, (0, 2, 1))            # PyTorch (bs, HW, attrs)


def _reference(x, conv_w, conv_b, stride, num_classes):
    """Pure-JAX reference mirroring the PyTorch forward (targets=None)."""
    bs, C, H, W = x.shape
    conv = jnp.einsum("bchw,oc->bohw", x, conv_w.reshape(2, C)) + conv_b.reshape(1, 2, 1, 1)
    wh = jnp.exp(conv)                              # (bs, 2, H, W)
    pred = jnp.transpose(x, (0, 2, 3, 1))           # (bs, H, W, C)
    whp = jnp.transpose(wh, (0, 2, 3, 1))           # (bs, H, W, 2)
    sx = jax.nn.sigmoid(pred[..., 0])
    sy = jax.nn.sigmoid(pred[..., 1])
    w_ = pred[..., 2]
    h_ = pred[..., 3]
    conf = jax.nn.sigmoid(pred[..., 4])
    cls = jax.nn.sigmoid(pred[..., 5:])
    gx = jnp.arange(W, dtype=jnp.float32)[None, None, :]
    gy = jnp.arange(H, dtype=jnp.float32)[None, :, None]
    bx = (sx + gx) * stride
    by = (sy + gy) * stride
    bw = jnp.exp(w_) * whp[..., 0] * stride
    bh = jnp.exp(h_) * whp[..., 1] * stride
    out = jnp.concatenate(
        [bx[..., None], by[..., None], bw[..., None], bh[..., None], conf[..., None], cls],
        axis=-1,
    )
    return out.reshape(bs, H * W, 5 + num_classes)


def _run_case(key, bs, num_classes, H, W, stride, channels_last):
    C = 5 + num_classes
    k1, k2, k3 = jax.random.split(key, 3)
    x = jax.random.normal(k1, (bs, C, H, W), dtype=jnp.float32)
    conv_w = jax.random.normal(k2, (2, C, 1, 1), dtype=jnp.float32) * 0.1
    conv_b = jax.random.normal(k3, (2,), dtype=jnp.float32) * 0.1

    out = yolo_forward_infer(x, conv_w, conv_b, stride=stride,
                             num_classes=num_classes, channels_last=channels_last)
    out = jax.block_until_ready(out)

    ref = _reference(x, conv_w, conv_b, stride, num_classes)   # (bs, HW, C)
    if channels_last:
        assert out.shape == (bs, H * W, C)
        got = out
    else:
        assert out.shape == (bs, C, H * W)
        got = jnp.transpose(out, (0, 2, 1))
    # tanh-form sigmoid and fused exp differ from the reference only in
    # last-bit rounding.
    assert jnp.allclose(got, ref, atol=1e-4, rtol=1e-4), "mismatch vs reference"


if __name__ == "__main__":
    # Module config (synthetic): free_anchors=1; anchors/config_anchor only
    # affect the (untranslated) training branch.
    key = jax.random.PRNGKey(0)
    k1, k2, k3 = jax.random.split(key, 3)

    # Case 1: bs=2, num_classes=4 (C=9), 16x16, stride=8 — PyTorch layout parity.
    _run_case(k1, bs=2, num_classes=4, H=16, W=16, stride=8, channels_last=True)
    # Case 2: bs=1, 13x13 (HW not a multiple of 128 -> padded path), stride=16.
    _run_case(k2, bs=1, num_classes=2, H=13, W=13, stride=16, channels_last=False)
    # Case 3: bs=4 — exercises batch folding (b_tile > 1) in one grid block.
    _run_case(k3, bs=4, num_classes=4, H=16, W=16, stride=8, channels_last=False)

    print("KERNEL_OK")
</pallas_src>

<mosaic_0001>
module attributes {stable_mosaic.version = 11 : i64} {
  func.func @_yolo_infer_kernel(%arg0: i32, %arg1: i32, %arg2: memref<2x256xf32, #tpu.memory_space<vmem>>, %arg3: memref<1x9x256xf32, #tpu.memory_space<vmem>>, %arg4: memref<2x9xf32, #tpu.memory_space<vmem>>, %arg5: memref<2x1xf32, #tpu.memory_space<vmem>>, %arg6: memref<1x9x256xf32, #tpu.memory_space<vmem>>) attributes {dimension_semantics = [#tpu.dimension_semantics<parallel>, #tpu.dimension_semantics<parallel>], iteration_bounds = array<i64: 1, 2>, scalar_prefetch = 0 : i64, scratch_operands = 0 : i64, tpu.core_type = #tpu.core_type<tc>, window_params = [{transform_indices = @transform_0, window_bounds = array<i64: 2, 256>}, {transform_indices = @transform_1, window_bounds = array<i64: 1, 9, 256>}, {pipeline_mode = #tpu.pipeline_mode<synchronous>, transform_indices = @transform_2, window_bounds = array<i64: 2, 9>}, {pipeline_mode = #tpu.pipeline_mode<synchronous>, transform_indices = @transform_3, window_bounds = array<i64: 2, 1>}, {transform_indices = @transform_4, window_bounds = array<i64: 1, 9, 256>}]} {
    %c0 = arith.constant 0 : index
    %c0_0 = arith.constant 0 : index
    %0 = vector.load %arg2[%c0, %c0_0] : memref<2x256xf32, #tpu.memory_space<vmem>>, vector<2x256xf32>
    %c0_1 = arith.constant 0 : index
    %c0_2 = arith.constant 0 : index
    %1 = vector.load %arg4[%c0_1, %c0_2] : memref<2x9xf32, #tpu.memory_space<vmem>>, vector<2x9xf32>
    %c0_3 = arith.constant 0 : index
    %c0_4 = arith.constant 0 : index
    %2 = vector.load %arg5[%c0_3, %c0_4] : memref<2x1xf32, #tpu.memory_space<vmem>>, vector<2x1xf32>
    %c0_5 = arith.constant 0 : index
    %c0_6 = arith.constant 0 : index
    %c0_7 = arith.constant 0 : index
    %3 = vector.load %arg3[%c0_5, %c0_6, %c0_7] : memref<1x9x256xf32, #tpu.memory_space<vmem>>, vector<1x9x256xf32>
    %4 = vector.shape_cast %3 : vector<1x9x256xf32> to vector<9x256xf32>
    %cst = arith.constant dense<0.000000e+00> : vector<2x256xf32>
    %5 = tpu.matmul %1, %4, %cst {dimension_numbers = #tpu.dot_dimension_numbers<[1], [0], [0], [1], [0, 0, 1, 1], [], []>} : vector<2x9xf32>, vector<9x256xf32>, vector<2x256xf32> -> vector<2x256xf32>
    %c0_i32 = arith.constant 0 : i32
    %c0_i32_8 = arith.constant 0 : i32
    %c0_i32_9 = arith.constant 0 : i32
    %6 = tpu.memref_slice %arg3[%c0_i32, %c0_i32_8, %c0_i32_9] : memref<1x9x256xf32, #tpu.memory_space<vmem>> -> memref<1x9x256xf32, #tpu.memory_space<vmem>>
    %7 = tpu.memref_squeeze %6 : memref<1x9x256xf32, #tpu.memory_space<vmem>> -> memref<9x256xf32, #tpu.memory_space<vmem>>
    %c0_10 = arith.constant 0 : index
    %c0_11 = arith.constant 0 : index
    %8 = vector.load %7[%c0_10, %c0_11] : memref<9x256xf32, #tpu.memory_space<vmem>>, vector<2x256xf32>
    %cst_12 = arith.constant 5.000000e-01 : f32
    %9 = vector.broadcast %cst_12 : f32 to vector<2x256xf32>
    %10 = arith.mulf %9, %8 : vector<2x256xf32>
    %11 = math.tanh %10 : vector<2x256xf32>
    %cst_13 = arith.constant 4.000000e+00 : f32
    %12 = vector.broadcast %cst_13 : f32 to vector<2x256xf32>
    %13 = arith.mulf %12, %11 : vector<2x256xf32>
    %14 = arith.addf %13, %0 : vector<2x256xf32>
    %c0_i32_14 = arith.constant 0 : i32
    %c0_i32_15 = arith.constant 0 : i32
    %c0_i32_16 = arith.constant 0 : i32
    %15 = tpu.memref_slice %arg6[%c0_i32_14, %c0_i32_15, %c0_i32_16] : memref<1x9x256xf32, #tpu.memory_space<vmem>> -> memref<1x9x256xf32, #tpu.memory_space<vmem>>
    %16 = tpu.memref_squeeze %15 : memref<1x9x256xf32, #tpu.memory_space<vmem>> -> memref<9x256xf32, #tpu.memory_space<vmem>>
    %c0_17 = arith.constant 0 : index
    %c0_18 = arith.constant 0 : index
    %17 = vector.load %16[%c0_17, %c0_18] : memref<9x256xf32, #tpu.memory_space<vmem>>, vector<2x256xf32>
    tpu.vector_store %16[%c0_17, %c0_18], %14 {strides = array<i32>} : memref<9x256xf32, #tpu.memory_space<vmem>>, vector<2x256xf32>,
    %c0_i32_19 = arith.constant 0 : i32
    %c0_i32_20 = arith.constant 0 : i32
    %c0_i32_21 = arith.constant 0 : i32
    %18 = tpu.memref_slice %arg3[%c0_i32_19, %c0_i32_20, %c0_i32_21] : memref<1x9x256xf32, #tpu.memory_space<vmem>> -> memref<1x9x256xf32, #tpu.memory_space<vmem>>
    %19 = tpu.memref_squeeze %18 : memref<1x9x256xf32, #tpu.memory_space<vmem>> -> memref<9x256xf32, #tpu.memory_space<vmem>>
    %c2 = arith.constant 2 : index
    %c0_22 = arith.constant 0 : index
    %20 = vector.load %19[%c2, %c0_22] : memref<9x256xf32, #tpu.memory_space<vmem>>, vector<2x256xf32>
    %21 = arith.addf %20, %5 : vector<2x256xf32>
    %22 = math.exp %21 : vector<2x256xf32>
    %23 = vector.broadcast %2 : vector<2x1xf32> to vector<2x256xf32>
    %24 = arith.mulf %22, %23 : vector<2x256xf32>
    %c0_i32_23 = arith.constant 0 : i32
    %c0_i32_24 = arith.constant 0 : i32
    %c0_i32_25 = arith.constant 0 : i32
    %25 = tpu.memref_slice %arg6[%c0_i32_23, %c0_i32_24, %c0_i32_25] : memref<1x9x256xf32, #tpu.memory_space<vmem>> -> memref<1x9x256xf32, #tpu.memory_space<vmem>>
    %26 = tpu.memref_squeeze %25 : memref<1x9x256xf32, #tpu.memory_space<vmem>> -> memref<9x256xf32, #tpu.memory_space<vmem>>
    %c2_26 = arith.constant 2 : index
    %c0_27 = arith.constant 0 : index
    %27 = vector.load %26[%c2_26, %c0_27] : memref<9x256xf32, #tpu.memory_space<vmem>>, vector<2x256xf32>
    tpu.vector_store %26[%c2_26, %c0_27], %24 {strides = array<i32>} : memref<9x256xf32, #tpu.memory_space<vmem>>, vector<2x256xf32>,
    %c0_i32_28 = arith.constant 0 : i32
    %c0_i32_29 = arith.constant 0 : i32
    %c0_i32_30 = arith.constant 0 : i32
    %28 = tpu.memref_slice %arg3[%c0_i32_28, %c0_i32_29, %c0_i32_30] : memref<1x9x256xf32, #tpu.memory_space<vmem>> -> memref<1x9x256xf32, #tpu.memory_space<vmem>>
    %29 = tpu.memref_squeeze %28 : memref<1x9x256xf32, #tpu.memory_space<vmem>> -> memref<9x256xf32, #tpu.memory_space<vmem>>
    %c4 = arith.constant 4 : index
    %c0_31 = arith.constant 0 : index
    %30 = vector.load %29[%c4, %c0_31] : memref<9x256xf32, #tpu.memory_space<vmem>>, vector<5x256xf32>
    %cst_32 = arith.constant 5.000000e-01 : f32
    %31 = vector.broadcast %cst_32 : f32 to vector<5x256xf32>
    %32 = arith.mulf %31, %30 : vector<5x256xf32>
    %33 = math.tanh %32 : vector<5x256xf32>
    %cst_33 = arith.constant 5.000000e-01 : f32
    %34 = vector.broadcast %cst_33 : f32 to vector<5x256xf32>
    %35 = arith.mulf %34, %33 : vector<5x256xf32>
    %cst_34 = arith.constant 5.000000e-01 : f32
    %36 = vector.broadcast %cst_34 : f32 to vector<5x256xf32>
    %37 = arith.addf %35, %36 : vector<5x256xf32>
    %c0_i32_35 = arith.constant 0 : i32
    %c0_i32_36 = arith.constant 0 : i32
    %c0_i32_37 = arith.constant 0 : i32
    %38 = tpu.memref_slice %arg6[%c0_i32_35, %c0_i32_36, %c0_i32_37] : memref<1x9x256xf32, #tpu.memory_space<vmem>> -> memref<1x9x256xf32, #tpu.memory_space<vmem>>
    %39 = tpu.memref_squeeze %38 : memref<1x9x256xf32, #tpu.memory_space<vmem>> -> memref<9x256xf32, #tpu.memory_space<vmem>>
    %c4_38 = arith.constant 4 : index
    %c0_39 = arith.constant 0 : index
    %40 = vector.load %39[%c4_38, %c0_39] : memref<9x256xf32, #tpu.memory_space<vmem>>, vector<5x256xf32>
    tpu.vector_store %39[%c4_38, %c0_39], %37 {strides = array<i32>} : memref<9x256xf32, #tpu.memory_space<vmem>>, vector<5x256xf32>,
    return
  }
  func.func @transform_0(%arg0: i32, %arg1: i32) -> (i32, i32) {
    %c0_i32 = arith.constant 0 : i32
    %c0_i32_0 = arith.constant 0 : i32
    return %c0_i32, %arg0 : i32, i32
  }
  func.func @transform_1(%arg0: i32, %arg1: i32) -> (i32, i32, i32) {
    %c0_i32 = arith.constant 0 : i32
    %c0_i32_0 = arith.constant 0 : i32
    return %arg1, %c0_i32, %arg0 : i32, i32, i32
  }
  func.func @transform_2(%arg0: i32, %arg1: i32) -> (i32, i32) {
    %c0_i32 = arith.constant 0 : i32
    %c0_i32_0 = arith.constant 0 : i32
    %c0_i32_1 = arith.constant 0 : i32
    return %c0_i32, %c0_i32_0 : i32, i32
  }
  func.func @transform_3(%arg0: i32, %arg1: i32) -> (i32, i32) {
    %c0_i32 = arith.constant 0 : i32
    %c0_i32_0 = arith.constant 0 : i32
    %c0_i32_1 = arith.constant 0 : i32
    return %c0_i32, %c0_i32_0 : i32, i32
  }
  func.func @transform_4(%arg0: i32, %arg1: i32) -> (i32, i32, i32) {
    %c0_i32 = arith.constant 0 : i32
    %c0_i32_0 = arith.constant 0 : i32
    return %arg1, %c0_i32, %arg0 : i32, i32, i32
  }
}

</mosaic_0001>

<llo_original>
// kernel: tpu_custom_call.1
$region0: #{tpu_custom_call.1}
  #allocation0 [shape = 'u32[]', space=smem, size = 0x4, offset = 0x4, fixed_abs, tag = 'smem constant byte address 0x4 - core index']
  #allocation1 [shape = 'u32[144,128]{1,0:T(1,128)}', space=vmem, size = 0x12000, scoped, tag = 'internal scratch']
  %s0 = inlined_call_operand.vmem [shape: f32[2,256], index: 0, kind: input, shape index: {}]
  %s1 = inlined_call_operand.vmem [shape: f32[2,9,256], index: 1, kind: input, shape index: {}]
  %s2 = inlined_call_operand.vmem [shape: f32[2,9], index: 2, kind: input, shape index: {}]
  %s3 = inlined_call_operand.vmem [shape: f32[2,1], index: 3, kind: input, shape index: {}]
  %s4 = inlined_call_operand.vmem [shape: f32[2,9,256], index: 4, kind: output, shape index: {}]
  %s5 = sld [smem:[#allocation0]]
  $region49: #{tpu_custom_call.1} parent=0
    _
  %s7 = ssub.s32 1, %s5
  %s8 = scalar_select 0, %s7, %s5
  loop: start=0, step=1, limit=4
  $region2: #{tpu_custom_call.1} parent=0 // loop_pre_header
    _
  $region3: #{tpu_custom_call.1} parent=0 // loop_header
    %s10 = sphi 0, %s14
    %p11 = scmp.ge.s32.totalorder %s10, 4
    %s17 = sphi 0, %s29
    %s18 = sphi 0, %s25
    %s19 = sphi 0, %s17
    %s20 = sphi 0, %s18
    %s21 = sphi 0, %s19
    %s22 = sphi 0, %s20
    %s32 = sphi 0, %s34
    %s35 = sphi 0, %s32
    %s36 = sphi 0, %s35
    %s52 = sphi 0, %s36
    %s60 = sphi 0, %s62
    %s63 = sphi 0, %s60
    %s64 = sphi 0, %s63
    %s80 = sphi 0, %s64
    %s84 = sphi 0, %s84
    %s86 = sphi 0, %s84
    %s87 = sphi 0, %s86
    %s101 = sphi 0, %s87
    %s105 = sphi 0, %s105
    %s107 = sphi 0, %s105
    %s108 = sphi 0, %s107
    %s122 = sphi 0, %s108
    %s130 = sphi 0, %s132
    %s133 = sphi 0, %s130
    %s134 = sphi 0, %s133
    %s150 = sphi 0, %s134
  $region4: #{tpu_custom_call.1} parent=0 // loop_header_branch
    %13 = sbr.rel (%p11) target = $region8
  $region5: #{tpu_custom_call.1} parent=0 // loop_body
    %s15 = ssub.s32 %s10, 1
    %s16 = ssub.s32 %s10, 2
    %s23 = sadd.s32 1, %s18
    %p24 = scmp.ge.s32.totalorder %s23, 2
    %s25 = scalar_select %p24, 0, %s23
    %s26 = sadd.s32 1, %s17
    %s27 = scalar_select %p24, %s26, %s17
    %p28 = scmp.ge.s32.totalorder %s27, 1
    %s29 = scalar_select %p28, 0, %s27
    %s30 = ssub.s32 %s17, %s29
    %p31 = scmp.eq.s32.totalorder %s30, 0
    %s33 = sadd.s32 %s32, 1
    %s34 = scalar_select %p31, %s32, %s33
    %p37 = pneg %p31
    %p38 = scmp.eq.s32.totalorder %s10, 1
    %p39 = por %p37, %p38
    %p40 = scmp.ne.s32.totalorder %s32, %s35
    %p41 = scmp.eq.s32.totalorder %s10, 0
    %p42 = por %p40, %p41
    %p43 = scmp.ne.s32.totalorder %s32, %s35
    %p44 = scmp.eq.s32.totalorder %s15, 1
    %p45 = por %p43, %p44
    %p46 = scmp.ne.s32.totalorder %s35, %s36
    %p47 = scmp.eq.s32.totalorder %s15, 0
    %p48 = por %p46, %p47
    %p49 = scmp.ne.s32.totalorder %s35, %s36
    %p50 = scmp.eq.s32.totalorder %s16, 1
    %p51 = por %p49, %p50
    %p53 = scmp.ne.s32.totalorder %s36, %s52
    %p54 = scmp.eq.s32.totalorder %s16, 0
    %p55 = por %p53, %p54
    %s56 = ssub.s32 %s18, %s25
    %s57 = ssub.s32 %s17, %s29
    %s58 = sor.u32 %s56, %s57
    %p59 = scmp.eq.s32.totalorder %s58, 0
    %s61 = sadd.s32 %s60, 1
    %s62 = scalar_select %p59, %s60, %s61
    %p65 = pneg %p59
    %p66 = scmp.eq.s32.totalorder %s10, 1
    %p67 = por %p65, %p66
    %p68 = scmp.ne.s32.totalorder %s60, %s63
    %p69 = scmp.eq.s32.totalorder %s10, 0
    %p70 = por %p68, %p69
    %p71 = scmp.ne.s32.totalorder %s60, %s63
    %p72 = scmp.eq.s32.totalorder %s15, 1
    %p73 = por %p71, %p72
    %p74 = scmp.ne.s32.totalorder %s63, %s64
    %p75 = scmp.eq.s32.totalorder %s15, 0
    %p76 = por %p74, %p75
    %p77 = scmp.ne.s32.totalorder %s63, %s64
    %p78 = scmp.eq.s32.totalorder %s16, 1
    %p79 = por %p77, %p78
    %p81 = scmp.ne.s32.totalorder %s64, %s80
    %p82 = scmp.eq.s32.totalorder %s16, 0
    %p83 = por %p81, %p82
    %s85 = sadd.s32 %s84, 1
    %p88 = scmp.eq.s32.totalorder %s10, 1
    %p89 = scmp.ne.s32.totalorder %s84, %s86
    %p90 = scmp.eq.s32.totalorder %s10, 0
    %p91 = por %p89, %p90
    %p92 = scmp.ne.s32.totalorder %s84, %s86
    %p93 = scmp.eq.s32.totalorder %s15, 1
    %p94 = por %p92, %p93
    %p95 = scmp.ne.s32.totalorder %s86, %s87
    %p96 = scmp.eq.s32.totalorder %s15, 0
    %p97 = por %p95, %p96
    %p98 = scmp.ne.s32.totalorder %s86, %s87
    %p99 = scmp.eq.s32.totalorder %s16, 1
    %p100 = por %p98, %p99
    %p102 = scmp.ne.s32.totalorder %s87, %s101
    %p103 = scmp.eq.s32.totalorder %s16, 0
    %p104 = por %p102, %p103
    %s106 = sadd.s32 %s105, 1
    %p109 = scmp.eq.s32.totalorder %s10, 1
    %p110 = scmp.ne.s32.totalorder %s105, %s107
    %p111 = scmp.eq.s32.totalorder %s10, 0
    %p112 = por %p110, %p111
    %p113 = scmp.ne.s32.totalorder %s105, %s107
    %p114 = scmp.eq.s32.totalorder %s15, 1
    %p115 = por %p113, %p114
    %p116 = scmp.ne.s32.totalorder %s107, %s108
    %p117 = scmp.eq.s32.totalorder %s15, 0
    %p118 = por %p116, %p117
    %p119 = scmp.ne.s32.totalorder %s107, %s108
    %p120 = scmp.eq.s32.totalorder %s16, 1
    %p121 = por %p119, %p120
    %p123 = scmp.ne.s32.totalorder %s108, %s122
    %p124 = scmp.eq.s32.totalorder %s16, 0
    %p125 = por %p123, %p124
    %s126 = ssub.s32 %s18, %s25
    %s127 = ssub.s32 %s17, %s29
    %s128 = sor.u32 %s126, %s127
    %p129 = scmp.eq.s32.totalorder %s128, 0
    %s131 = sadd.s32 %s130, 1
    %s132 = scalar_select %p129, %s130, %s131
    %p135 = pneg %p129
    %p136 = scmp.eq.s32.totalorder %s10, 1
    %p137 = por %p135, %p136
    %p138 = scmp.ne.s32.totalorder %s130, %s133
    %p139 = scmp.eq.s32.totalorder %s10, 0
    %p140 = por %p138, %p139
    %p141 = scmp.ne.s32.totalorder %s130, %s133
    %p142 = scmp.eq.s32.totalorder %s15, 1
    %p143 = por %p141, %p142
    %p144 = scmp.ne.s32.totalorder %s133, %s134
    %p145 = scmp.eq.s32.totalorder %s15, 0
    %p146 = por %p144, %p145
    %p147 = scmp.ne.s32.totalorder %s133, %s134
    %p148 = scmp.eq.s32.totalorder %s16, 1
    %p149 = por %p147, %p148
    %p151 = scmp.ne.s32.totalorder %s134, %s150
    %p152 = scmp.eq.s32.totalorder %s16, 0
    %p153 = por %p151, %p152
    %p154 = scmp.le.s32.totalorder 1, %s10
    %p155 = scmp.lt.s32.totalorder %s10, 3
    %p156 = pnand %p154, %p155
    %p157 = pneg %p156
    // Predicated region
    $region9: #{tpu_custom_call.1} parent=5 // pred_check
      _
    $region10: #{tpu_custom_call.1} parent=5 // pred_check_branch
      %159 = sbr.rel (%p156) target = $region12
    $region11: #{tpu_custom_call.1} parent=5 // pred_region
      %s160 = ssub.s32 %s10, 1
      // Predicated region
      $region13: #{tpu_custom_call.1} parent=11 // pred_check
        %p161 = pneg %p48
      $region14: #{tpu_custom_call.1} parent=11 // pred_check_branch
        %163 = sbr.rel (%p161) target = $region16
      $region15: #{tpu_custom_call.1} parent=11 // pred_region
        %s164 = smul.u32 2, %s19
        %p165 = scmp.lt.s32.totalorder %s164, 1
        %s166 = scalar_select %p165, %s164, 1
        %s167 = smul.addr %s166, 2
        %s168 = scalar_lea.vmem %s0, %s167
        %s169 = smul.u32 2, %s19
      $region16: #{tpu_custom_call.1} parent=11 // pred_fallthru
        _
      // Predicated region
      $region17: #{tpu_custom_call.1} parent=11 // pred_check
        %p170 = pneg %p97
      $region18: #{tpu_custom_call.1} parent=11 // pred_check_branch
        %172 = sbr.rel (%p170) target = $region20
      $region19: #{tpu_custom_call.1} parent=11 // pred_region
        _
      $region20: #{tpu_custom_call.1} parent=11 // pred_fallthru
        _
      // Predicated region
      $region21: #{tpu_custom_call.1} parent=11 // pred_check
        %p173 = pneg %p118
      $region22: #{tpu_custom_call.1} parent=11 // pred_check_branch
        %175 = sbr.rel (%p173) target = $region24
      $region23: #{tpu_custom_call.1} parent=11 // pred_region
        _
      $region24: #{tpu_custom_call.1} parent=11 // pred_fallthru
        _
    $region12: #{tpu_custom_call.1} parent=5 // pred_fallthru
      _
    %p176 = scmp.lt.s32.totalorder %s10, 2
    // Predicated region
    $region25: #{tpu_custom_call.1} parent=5 // pred_check
      %p177 = pneg %p176
    $region26: #{tpu_custom_call.1} parent=5 // pred_check_branch
      %179 = sbr.rel (%p177) target = $region28
    $region27: #{tpu_custom_call.1} parent=5 // pred_region
      // Predicated region
      $region29: #{tpu_custom_call.1} parent=27 // pred_check
        %p180 = pneg %p70
      $region30: #{tpu_custom_call.1} parent=27 // pred_check_branch
        %182 = sbr.rel (%p180) target = $region32
      $region31: #{tpu_custom_call.1} parent=27 // pred_region
        %s183 = smul.u32 2, %s17
        %p184 = scmp.lt.s32.totalorder %s18, 1
        %s185 = scalar_select %p184, %s18, 1
        %p186 = scmp.lt.s32.totalorder %s183, 1
        %s187 = scalar_select %p186, %s183, 1
        %s188 = smul.addr %s185, 4
        %s189 = sadd.s32 %s187, %s188
        %s190 = smul.addr %s189, 8
        %s191 = scalar_lea.vmem %s1, %s190
        %s192 = smul.u32 2, %s17
      $region32: #{tpu_custom_call.1} parent=27 // pred_fallthru
        _
    $region28: #{tpu_custom_call.1} parent=5 // pred_fallthru
      _
    %p193 = scmp.le.s32.totalorder 1, %s10
    %p194 = scmp.lt.s32.totalorder %s10, 3
    %p195 = pnand %p193, %p194
    %p196 = pneg %p195
    // Predicated region
    $region33: #{tpu_custom_call.1} parent=5 // pred_check
      _
    $region34: #{tpu_custom_call.1} parent=5 // pred_check_branch
      %198 = sbr.rel (%p195) target = $region36
    $region35: #{tpu_custom_call.1} parent=5 // pred_region
      %s199 = ssub.s32 %s10, 1
      %s200 = smul.u32 2, %s19
      %p201 = scmp.lt.s32.totalorder %s200, 1
      %s202 = scalar_select %p201, %s200, 1
      %s203 = smul.addr %s202, 2
      %s204 = scalar_lea.vmem %s0, %s203
      %p205 = pneg %p48
      %p206 = pneg %p45
      %s207 = smul.u32 2, %s19
      %p208 = scmp.lt.s32.totalorder %s20, 1
      %s209 = scalar_select %p208, %s20, 1
      %p210 = scmp.lt.s32.totalorder %s207, 1
      %s211 = scalar_select %p210, %s207, 1
      %s212 = smul.addr %s209, 4
      %s213 = sadd.s32 %s211, %s212
      %s214 = smul.addr %s213, 8
      %s215 = scalar_lea.vmem %s1, %s214
      %p216 = pneg %p76
      %p217 = pneg %p73
      %p218 = pneg %p97
      %p219 = pneg %p94
      %p220 = pneg %p118
      %p221 = pneg %p115
      %p222 = pneg %p146
      %p223 = pneg %p143
      %s224 = smul.u32 2, %s19
      %p225 = scmp.lt.s32.totalorder %s20, 1
      %s226 = scalar_select %p225, %s20, 1
      %p227 = scmp.lt.s32.totalorder %s224, 1
      %s228 = scalar_select %p227, %s224, 1
      %s229 = smul.addr %s226, 4
      %s230 = sadd.s32 %s228, %s229
      %s231 = smul.addr %s230, 8
      %s232 = scalar_lea.vmem %s4, %s231
      %s233 = smul.u32 2, %s19
      %p234 = scmp.lt.s32.totalorder %s233, 1
      %s235 = scalar_select %p234, %s233, 1
      %s236 = smul.addr %s235, 2
      %s237 = scalar_lea.vmem %s0, %s236
      %s238 = smul.u32 2, %s19
      %s239 = smul.u32 2, %s19
      %p240 = scmp.lt.s32.totalorder %s20, 1
      %s241 = scalar_select %p240, %s20, 1
      %p242 = scmp.lt.s32.totalorder %s239, 1
      %s243 = scalar_select %p242, %s239, 1
      %s244 = smul.addr %s241, 4
      %s245 = sadd.s32 %s243, %s244
      %s246 = smul.addr %s245, 8
      %s247 = scalar_lea.vmem %s1, %s246
      %s248 = smul.u32 2, %s19
      %s249 = smul.u32 2, %s19
      %p250 = scmp.lt.s32.totalorder %s20, 1
      %s251 = scalar_select %p250, %s20, 1
      %p252 = scmp.lt.s32.totalorder %s249, 1
      %s253 = scalar_select %p252, %s249, 1
      %s254 = smul.addr %s251, 4
      %s255 = sadd.s32 %s253, %s254
      %s256 = smul.addr %s255, 8
      %s257 = scalar_lea.vmem %s4, %s256
      %s258 = smul.u32 2, %s19
      %v259 = vld [vmem:[%s237] sm:$0xf]
      %v260 = vld [vmem:[%s2] sm:$0x3]
      %v261 = vld [vmem:[%s3] sm:$0x3]
      %v262 = vld [vmem:[%s247] sm:$0xff]
      %v263 = vld [vmem:[%s247 + $0x8] sm:$0xff]
      %v264 = vld [vmem:[%s247 + $0x10] sm:$0x1]
      %v265 = vld [vmem:[%s247 + $0x18] sm:$0x1]
      %vm266 = vcmask 72704
      %v268 = vsel %vm266, %v260, 0
      %vm270 = vcmask 1040384
      %v272 = vsel %vm270, %v264, 0
      %v275 = vsel %vm270, %v265, 0
      %277 = vmatprep.subr.mxu0 %v263
      %278 = vmatpush1.msra.mxu0 %v262
      %279 = vmatprep.subr.mxu0 %v275
      %280 = vmatpush1.msra.mxu0 %v272
      %281 = vmatprep.subr.mxu0 0.0
      %282 = vmatpush1.msra.mxu0 0.0
      %283 = vmatprep.subr.mxu0 0.0
      %284 = vmatpush1.msra.mxu0 0.0
      %285 = vmatprep.subr.mxu0 0.0
      %286 = vmatpush1.msra.mxu0 0.0
      %287 = vmatprep.subr.mxu0 0.0
      %288 = vmatpush1.msra.mxu0 0.0
      %289 = vmatprep.subr.mxu0 0.0
      %290 = vmatpush1.msra.mxu0 0.0
      %291 = vmatprep.subr.mxu0 0.0
      %292 = vmatpush1.msra.mxu0 0.0
      %293 = vmatprep.subr.mxu0 0.0
      %294 = vmatpush1.msra.mxu0 0.0
      %295 = vmatprep.subr.mxu0 0.0
      %296 = vmatpush1.msra.mxu0 0.0
      %297 = vmatprep.subr.mxu0 0.0
      %298 = vmatpush1.msra.mxu0 0.0
      %299 = vmatprep.subr.mxu0 0.0
      %300 = vmatpush1.msra.mxu0 0.0
      %301 = vmatprep.subr.mxu0 0.0
      %302 = vmatpush1.msra.mxu0 0.0
      %303 = vmatprep.subr.mxu0 0.0
      %304 = vmatpush1.msra.mxu0 0.0
      %305 = vmatprep.subr.mxu0 0.0
      %306 = vmatpush1.msra.mxu0 0.0
      %307 = vmatprep.subr.mxu0 0.0
      %308 = vmatpush1.msra.mxu0 0.0
      %309 = vmatprep.subr.mxu0 0.0
      %310 = vmatpush1.msra.mxu0 0.0
      %311 = vmatprep.subr.mxu0 0.0
      %312 = vmatpush1.msra.mxu0 0.0
      %313 = vmatprep.subr.mxu0 0.0
      %314 = vmatpush1.msra.mxu0 0.0
      %315 = vmatprep.subr.mxu0 0.0
      %316 = vmatpush1.msra.mxu0 0.0
      %317 = vmatprep.subr.mxu0 0.0
      %318 = vmatpush1.msra.mxu0 0.0
      %319 = vmatprep.subr.mxu0 0.0
      %320 = vmatpush1.msra.mxu0 0.0
      %321 = vmatprep.subr.mxu0 0.0
      %322 = vmatpush1.msra.mxu0 0.0
      %323 = vmatprep.subr.mxu0 0.0
      %324 = vmatpush1.msra.mxu0 0.0
      %325 = vmatprep.subr.mxu0 0.0
      %326 = vmatpush1.msra.mxu0 0.0
      %327 = vmatprep.subr.mxu0 0.0
      %328 = vmatpush1.msra.mxu0 0.0
      %329 = vmatprep.subr.mxu0 0.0
      %330 = vmatpush1.msra.mxu0 0.0
      %331 = vmatprep.subr.mxu0 0.0
      %332 = vmatpush1.msra.mxu0 0.0
      %333 = vmatprep.subr.mxu0 0.0
      %334 = vmatpush1.msra.mxu0 0.0
      %335 = vmatprep.subr.mxu0 0.0
      %336 = vmatpush1.msra.mxu0 0.0
      %337 = vmatprep.subr.mxu0 0.0
      %338 = vmatpush1.msra.mxu0 0.0
      %339 = vmatprep.subr.mxu0 0.0
      %340 = vmatpush1.msra.mxu0 0.0
      %341 = vmatprep.mubr.f32.mxu0 0.0
      %342 = vmatmul.mubr.f32.gmra.mrb[0].mxu0 %v268
      %v343 = vpop.f32.mrb[0].mxu0
      %v344 = vadd.f32 0.0, %v343
      %v345 = vpop.f32.mrb[0].mxu0
      %v346 = vadd.f32 0.0, %v345
      %347 = vdwg.mxu0
      %v348 = vld [vmem:[%s247] sm:$0x3]
      %v349 = vld [vmem:[%s247 + $0x8] sm:$0x3]
      %v350 = vmul.f32 %v348, 0.5
      %v351 = vmul.f32 %v349, 0.5
      %v352 = vtanh.pop %v350
      %v353 = vtanh.pop %v351
      %v354 = vmul.f32 %v352, 4.0
      %v355 = vmul.f32 %v353, 4.0
      %v358 = vunpack.c.l.s4 1983009808
      %v359 = vunpack.c.0.s8 %v358
      %v360 = vlaneseq
      %v361 = vshrl.u32 %v360, 7
      %v362 = vsub.s32 %v359, %v361
      %v363 = vrot.slane %v259, %v362
      %v364 = vcombine.high %v363, %v363
      %v367 = vadd.f32 %v354, %v363
      %v368 = vadd.f32 %v355, %v364
      %369 = vst [vmem:[%s257] sm:$0x3] %v367
      %370 = vst [vmem:[%s257 + $0x8] sm:$0x3] %v368
      %v371 = vld [vmem:[%s247] sm:$0xc]
      %v372 = vld [vmem:[%s247 + $0x8] sm:$0xc]
      %v375 = vrot.slane %v344, 6
      %v376 = vrot.slane %v346, 6
      %v379 = vadd.f32 %v371, %v375
      %v380 = vadd.f32 %v372, %v376
      %v381 = vmul.f32 %v379, 1.442695
      %v382 = vpow.pop %v381
      %v383 = vmul.f32 %v380, 1.442695
      %v384 = vpow.pop %v383
      %386 = vset.pattern.permute.xlu0 0
      %387 = vperm.xlu0 %386, %v261
      %v388 = vpop.permute.xlu0 %387
      %v389 = vrot.slane %v388, 6
      %v391 = vmul.f32 %v382, %v389
      %v392 = vmul.f32 %v384, %v389
      %393 = vst [vmem:[%s257] sm:$0xc] %v391
      %394 = vst [vmem:[%s257 + $0x8] sm:$0xc] %v392
      %v395 = vld [vmem:[%s247] sm:$0xf0]
      %v396 = vld [vmem:[%s247 + $0x8] sm:$0xf0]
      %v397 = vld [vmem:[%s247 + $0x10] sm:$0x1]
      %v398 = vld [vmem:[%s247 + $0x18] sm:$0x1]
      %v399 = vmul.f32 %v395, 0.5
      %v400 = vmul.f32 %v396, 0.5
      %v401 = vmul.f32 %v397, 0.5
      %v402 = vmul.f32 %v398, 0.5
      %v403 = vtanh.pop %v399
      %v404 = vtanh.pop %v400
      %v405 = vtanh.pop %v401
      %v406 = vtanh.pop %v402
      %v407 = vmul.f32 %v403, 0.5
      %v408 = vmul.f32 %v404, 0.5
      %v409 = vmul.f32 %v405, 0.5
      %v410 = vmul.f32 %v406, 0.5
      %v411 = vadd.f32 %v407, 0.5
      %v412 = vadd.f32 %v408, 0.5
      %v413 = vadd.f32 %v409, 0.5
      %v414 = vadd.f32 %v410, 0.5
      %415 = vst [vmem:[%s257] sm:$0xf0] %v411
      %416 = vst [vmem:[%s257 + $0x8] sm:$0xf0] %v412
      %417 = vst [vmem:[%s257 + $0x10] sm:$0x1] %v413
      %418 = vst [vmem:[%s257 + $0x18] sm:$0x1] %v414
      %s419 = smul.u32 2, %s19
      %p420 = scmp.lt.s32.totalorder %s20, 1
      %s421 = scalar_select %p420, %s20, 1
      %p422 = scmp.lt.s32.totalorder %s419, 1
      %s423 = scalar_select %p422, %s419, 1
      %s424 = smul.addr %s421, 4
      %s425 = sadd.s32 %s423, %s424
      %s426 = smul.addr %s425, 8
      %s427 = scalar_lea.vmem %s4, %s426
      // Predicated region
      $region37: #{tpu_custom_call.1} parent=35 // pred_check
        %p428 = pneg %p143
      $region38: #{tpu_custom_call.1} parent=35 // pred_check_branch
        %430 = sbr.rel (%p428) target = $region40
      $region39: #{tpu_custom_call.1} parent=35 // pred_region
        %s431 = smul.u32 2, %s19
      $region40: #{tpu_custom_call.1} parent=35 // pred_fallthru
        _
    $region36: #{tpu_custom_call.1} parent=5 // pred_fallthru
      _
    %p432 = scmp.le.s32.totalorder 2, %s10
    // Predicated region
    $region41: #{tpu_custom_call.1} parent=5 // pred_check
      %p433 = pneg %p432
    $region42: #{tpu_custom_call.1} parent=5 // pred_check_branch
      %435 = sbr.rel (%p433) target = $region44
    $region43: #{tpu_custom_call.1} parent=5 // pred_region
      %s436 = ssub.s32 %s10, 2
      // Predicated region
      $region45: #{tpu_custom_call.1} parent=43 // pred_check
        %p437 = pneg %p149
      $region46: #{tpu_custom_call.1} parent=43 // pred_check_branch
        %439 = sbr.rel (%p437) target = $region48
      $region47: #{tpu_custom_call.1} parent=43 // pred_region
        %s440 = smul.u32 2, %s21
        %p441 = scmp.lt.s32.totalorder %s22, 1
        %s442 = scalar_select %p441, %s22, 1
        %p443 = scmp.lt.s32.totalorder %s440, 1
        %s444 = scalar_select %p443, %s440, 1
        %s445 = smul.addr %s442, 4
        %s446 = sadd.s32 %s444, %s445
        %s447 = smul.addr %s446, 8
        %s448 = scalar_lea.vmem %s4, %s447
      $region48: #{tpu_custom_call.1} parent=43 // pred_fallthru
        _
    $region44: #{tpu_custom_call.1} parent=5 // pred_fallthru
      _
  $region6: #{tpu_custom_call.1} parent=0 // loop_footer
    %s14 = sadd.s32 1, %s10
  $region7: #{tpu_custom_call.1} parent=0 // loop_footer_branch
    %9 = sbr.rel target = $region3
  $region8: #{tpu_custom_call.1} parent=0 // loop_exit
    _

</llo_original>
